<compile_context>
chip_gen: v7x
topology: tpu7x:2x2x1
jax: 0.10.0
libtpu: 0.0.40
codegen_flags: <defaults>
</compile_context>

<pallas_src>
import functools

import jax
import jax.numpy as jnp
from jax.experimental import pallas as pl
from jax.experimental.pallas import tpu as pltpu

LANE = 128      # TPU lane width (last-dim vreg width)
SUBLANE = 8     # TPU sublane width (second-to-last dim)


def _round_up(v, m):
    return (v + m - 1) // m * m


def _pad2d(a, rows, cols):
    r, c = a.shape
    if r == rows and c == cols:
        return a
    return jnp.pad(a, ((0, rows - r), (0, cols - c)))


def dae_kernel(x_ref, w1_ref, b1_ref, w2_ref, b2_ref, o_ref):
    # encoder: x @ W1 (bf16 operands, f32 accumulate on the MXU)
    h = jnp.dot(x_ref[...], w1_ref[...], preferred_element_type=jnp.float32)
    # bias + ReLU in f32 (cheap on all chips; avoids bf16 VPU emulation on v5e)
    h = jnp.maximum(h + b1_ref[...], 0.0)
    # decoder: h @ W2 (cast back to bf16 for the MXU, f32 accumulate)
    y = jnp.dot(h.astype(w2_ref.dtype), w2_ref[...],
                preferred_element_type=jnp.float32)
    o_ref[...] = (y + b2_ref[...]).astype(o_ref.dtype)


@functools.partial(jax.jit, static_argnames=("block_batch",))
def dae_forward(x, w1, b1, w2, b2, *, block_batch=256):
    """x: [B, input_dim]; w1: [input_dim, n_nodes]; b1: [1, n_nodes];
    w2: [n_nodes, input_dim]; b2: [1, input_dim]  ->  [B, input_dim] (f32)."""
    B, input_dim = x.shape
    n_nodes = w1.shape[1]
    out_dtype = jnp.float32
    compute_dtype = jnp.bfloat16  # MXU-native operands on v5e/v6e/v7x

    # ---- lane/sublane padding --------------------------------------------
    Dp = _round_up(input_dim, LANE)      # padded feature width (lane-dense)
    Np = _round_up(n_nodes, LANE)        # padded hidden width
    TB = min(block_batch, _round_up(B, SUBLANE))
    TB = _round_up(TB, SUBLANE)          # batch tile (sublane multiple)
    Bp = _round_up(B, TB)                # padded batch (grid-divisible)

    x_p = _pad2d(x, Bp, Dp).astype(compute_dtype)
    w1_p = _pad2d(w1, Dp, Np).astype(compute_dtype)
    b1_p = _pad2d(b1, 1, Np).astype(jnp.float32)
    w2_p = _pad2d(w2, Np, Dp).astype(compute_dtype)
    b2_p = _pad2d(b2, 1, Dp).astype(jnp.float32)

    grid = (Bp // TB,)

    # ---- derived VMEM budget (double-buffered tiles + resident weights) ---
    cbytes = jnp.dtype(compute_dtype).itemsize
    obytes = jnp.dtype(out_dtype).itemsize
    vmem_needed = (
        2 * TB * Dp * cbytes          # double-buffered x tile
        + 2 * TB * Dp * obytes        # double-buffered out tile
        + 2 * (Dp * Np + Np * Dp) * cbytes   # weights (2x for safety)
        + 2 * (Np + Dp) * 4           # biases
    )
    vmem_limit = max(int(vmem_needed * 2), 2 << 20)   # 2x headroom, >=2 MiB
    vmem_limit = min(vmem_limit, 32 << 20)            # stay within v7x budget

    cost = pl.CostEstimate(
        flops=4 * Bp * Dp * Np,  # two matmuls: 2*B*Dp*Np each
        transcendentals=0,
        bytes_accessed=(x_p.size * cbytes + w1_p.size * cbytes
                        + w2_p.size * cbytes + b1_p.size * 4 + b2_p.size * 4
                        + Bp * Dp * obytes),
    )

    out_p = pl.pallas_call(
        dae_kernel,
        out_shape=jax.ShapeDtypeStruct((Bp, Dp), out_dtype),
        grid=grid,
        in_specs=[
            pl.BlockSpec((TB, Dp), lambda i: (i, 0)),   # x: streamed per tile
            pl.BlockSpec((Dp, Np), lambda i: (0, 0)),   # W1: resident
            pl.BlockSpec((1, Np), lambda i: (0, 0)),    # b1: resident
            pl.BlockSpec((Np, Dp), lambda i: (0, 0)),   # W2: resident
            pl.BlockSpec((1, Dp), lambda i: (0, 0)),    # b2: resident
        ],
        out_specs=pl.BlockSpec((TB, Dp), lambda i: (i, 0)),
        compiler_params=pltpu.CompilerParams(
            dimension_semantics=("parallel",),          # megacore sharding (v7x)
            vmem_limit_bytes=vmem_limit,
        ),
        cost_estimate=cost,
    )(x_p, w1_p, b1_p, w2_p, b2_p)

    return out_p[:B, :input_dim]


def init_dae_params(key, input_dim, n_nodes, dtype=jnp.float32):
    """Deterministic init matching DAE._initialize_parameters:
    kaiming_normal_ on weights (fan_in, gain=sqrt(2)), normal(std=0.01) on bias.
    Weights are stored transposed vs. PyTorch ([in, out]) so the kernel does x @ W."""
    k1, k2, k3, k4 = jax.random.split(key, 4)
    std_enc = (2.0 / input_dim) ** 0.5
    std_dec = (2.0 / n_nodes) ** 0.5
    w1 = (jax.random.normal(k1, (input_dim, n_nodes)) * std_enc).astype(dtype)
    b1 = (jax.random.normal(k2, (1, n_nodes)) * 0.01).astype(dtype)
    w2 = (jax.random.normal(k3, (n_nodes, input_dim)) * std_dec).astype(dtype)
    b2 = (jax.random.normal(k4, (1, input_dim)) * 0.01).astype(dtype)
    return w1, b1, w2, b2


if __name__ == "__main__":
    # Small shapes consistent with DAE(input_dim, n_nodes, layer_idx)
    batch, input_dim, n_nodes = 8, 64, 32

    key = jax.random.PRNGKey(0)
    kx, kp = jax.random.split(key)
    x = jax.random.normal(kx, (batch, input_dim), dtype=jnp.float32)
    w1, b1, w2, b2 = init_dae_params(kp, input_dim, n_nodes)

    out = dae_forward(x, w1, b1, w2, b2)
    jax.block_until_ready(out)
    assert out.shape == (batch, input_dim)

    # Reference with the same bf16-operand / f32-accumulate numerics as the kernel.
    bf = jnp.bfloat16
    h_ref = jnp.maximum(
        jnp.dot(x.astype(bf), w1.astype(bf), preferred_element_type=jnp.float32) + b1, 0.0)
    y_ref = jnp.dot(h_ref.astype(bf), w2.astype(bf),
                    preferred_element_type=jnp.float32) + b2
    assert jnp.allclose(out, y_ref, atol=1e-2, rtol=1e-2), (
        float(jnp.max(jnp.abs(out - y_ref))))

    # Loose sanity check vs. the full-f32 forward (bf16 rounding only).
    y_f32 = jnp.maximum(x @ w1 + b1, 0.0) @ w2 + b2
    assert jnp.allclose(out, y_f32, atol=1e-1, rtol=1e-1)

    print("KERNEL_OK")
</pallas_src>

<mosaic_0001>
module attributes {stable_mosaic.version = 11 : i64} {
  func.func @dae_kernel(%arg0: i32, %arg1: memref<8x128xbf16, #tpu.memory_space<vmem>>, %arg2: memref<128x128xbf16, #tpu.memory_space<vmem>>, %arg3: memref<1x128xf32, #tpu.memory_space<vmem>>, %arg4: memref<128x128xbf16, #tpu.memory_space<vmem>>, %arg5: memref<1x128xf32, #tpu.memory_space<vmem>>, %arg6: memref<8x128xf32, #tpu.memory_space<vmem>>) attributes {dimension_semantics = [#tpu.dimension_semantics<parallel>], iteration_bounds = array<i64: 1>, scalar_prefetch = 0 : i64, scratch_operands = 0 : i64, tpu.core_type = #tpu.core_type<tc>, window_params = [{transform_indices = @transform_0, window_bounds = array<i64: 8, 128>}, {pipeline_mode = #tpu.pipeline_mode<synchronous>, transform_indices = @transform_1, window_bounds = array<i64: 128, 128>}, {pipeline_mode = #tpu.pipeline_mode<synchronous>, transform_indices = @transform_2, window_bounds = array<i64: 1, 128>}, {pipeline_mode = #tpu.pipeline_mode<synchronous>, transform_indices = @transform_3, window_bounds = array<i64: 128, 128>}, {pipeline_mode = #tpu.pipeline_mode<synchronous>, transform_indices = @transform_4, window_bounds = array<i64: 1, 128>}, {transform_indices = @transform_5, window_bounds = array<i64: 8, 128>}]} {
    %c0 = arith.constant 0 : index
    %c0_0 = arith.constant 0 : index
    %0 = vector.load %arg1[%c0, %c0_0] : memref<8x128xbf16, #tpu.memory_space<vmem>>, vector<8x128xbf16>
    %c0_1 = arith.constant 0 : index
    %c0_2 = arith.constant 0 : index
    %1 = vector.load %arg2[%c0_1, %c0_2] : memref<128x128xbf16, #tpu.memory_space<vmem>>, vector<128x128xbf16>
    %cst = arith.constant dense<0.000000e+00> : vector<8x128xf32>
    %2 = tpu.matmul %0, %1, %cst {dimension_numbers = #tpu.dot_dimension_numbers<[1], [0], [0], [1], [0, 0, 1, 1], [], []>} : vector<8x128xbf16>, vector<128x128xbf16>, vector<8x128xf32> -> vector<8x128xf32>
    %c0_3 = arith.constant 0 : index
    %c0_4 = arith.constant 0 : index
    %3 = vector.load %arg3[%c0_3, %c0_4] : memref<1x128xf32, #tpu.memory_space<vmem>>, vector<1x128xf32>
    %4 = vector.broadcast %3 : vector<1x128xf32> to vector<8x128xf32>
    %5 = arith.addf %2, %4 : vector<8x128xf32>
    %cst_5 = arith.constant 0.000000e+00 : f32
    %6 = vector.broadcast %cst_5 : f32 to vector<8x128xf32>
    %7 = arith.maximumf %5, %6 : vector<8x128xf32>
    %8 = arith.truncf %7 : vector<8x128xf32> to vector<8x128xbf16>
    %c0_6 = arith.constant 0 : index
    %c0_7 = arith.constant 0 : index
    %9 = vector.load %arg4[%c0_6, %c0_7] : memref<128x128xbf16, #tpu.memory_space<vmem>>, vector<128x128xbf16>
    %cst_8 = arith.constant dense<0.000000e+00> : vector<8x128xf32>
    %10 = tpu.matmul %8, %9, %cst_8 {dimension_numbers = #tpu.dot_dimension_numbers<[1], [0], [0], [1], [0, 0, 1, 1], [], []>} : vector<8x128xbf16>, vector<128x128xbf16>, vector<8x128xf32> -> vector<8x128xf32>
    %c0_9 = arith.constant 0 : index
    %c0_10 = arith.constant 0 : index
    %11 = vector.load %arg5[%c0_9, %c0_10] : memref<1x128xf32, #tpu.memory_space<vmem>>, vector<1x128xf32>
    %12 = vector.broadcast %11 : vector<1x128xf32> to vector<8x128xf32>
    %13 = arith.addf %10, %12 : vector<8x128xf32>
    %c0_11 = arith.constant 0 : index
    %c0_12 = arith.constant 0 : index
    %14 = vector.load %arg6[%c0_11, %c0_12] : memref<8x128xf32, #tpu.memory_space<vmem>>, vector<8x128xf32>
    tpu.vector_store %arg6[%c0_11, %c0_12], %13 {strides = array<i32>} : memref<8x128xf32, #tpu.memory_space<vmem>>, vector<8x128xf32>,
    return
  }
  func.func @transform_0(%arg0: i32) -> (i32, i32) {
    %c0_i32 = arith.constant 0 : i32
    %c0_i32_0 = arith.constant 0 : i32
    return %arg0, %c0_i32 : i32, i32
  }
  func.func @transform_1(%arg0: i32) -> (i32, i32) {
    %c0_i32 = arith.constant 0 : i32
    %c0_i32_0 = arith.constant 0 : i32
    %c0_i32_1 = arith.constant 0 : i32
    return %c0_i32, %c0_i32_0 : i32, i32
  }
  func.func @transform_2(%arg0: i32) -> (i32, i32) {
    %c0_i32 = arith.constant 0 : i32
    %c0_i32_0 = arith.constant 0 : i32
    %c0_i32_1 = arith.constant 0 : i32
    return %c0_i32, %c0_i32_0 : i32, i32
  }
  func.func @transform_3(%arg0: i32) -> (i32, i32) {
    %c0_i32 = arith.constant 0 : i32
    %c0_i32_0 = arith.constant 0 : i32
    %c0_i32_1 = arith.constant 0 : i32
    return %c0_i32, %c0_i32_0 : i32, i32
  }
  func.func @transform_4(%arg0: i32) -> (i32, i32) {
    %c0_i32 = arith.constant 0 : i32
    %c0_i32_0 = arith.constant 0 : i32
    %c0_i32_1 = arith.constant 0 : i32
    return %c0_i32, %c0_i32_0 : i32, i32
  }
  func.func @transform_5(%arg0: i32) -> (i32, i32) {
    %c0_i32 = arith.constant 0 : i32
    %c0_i32_0 = arith.constant 0 : i32
    return %arg0, %c0_i32 : i32, i32
  }
}

</mosaic_0001>

<llo_original>
// kernel: dae_forward.1
$region0: #{dae_forward.1}
  #allocation0 [shape = 'u32[]', space=smem, size = 0x4, offset = 0x4, fixed_abs, tag = 'smem constant byte address 0x4 - core index']
  #allocation1 [shape = 'u32[144,128]{1,0:T(1,128)}', space=vmem, size = 0x12000, scoped, tag = 'internal scratch']
  %s0 = inlined_call_operand.vmem [shape: bf16[8,128], index: 0, kind: input, shape index: {}]
  %s1 = inlined_call_operand.vmem [shape: bf16[128,128], index: 1, kind: input, shape index: {}]
  %s2 = inlined_call_operand.vmem [shape: f32[1,128], index: 2, kind: input, shape index: {}]
  %s3 = inlined_call_operand.vmem [shape: bf16[128,128], index: 3, kind: input, shape index: {}]
  %s4 = inlined_call_operand.vmem [shape: f32[1,128], index: 4, kind: input, shape index: {}]
  %s5 = inlined_call_operand.hbm [shape: f32[8,128], index: 5, kind: output, shape index: {}]
  %s6 = sld [smem:[#allocation0]]
  $region30: #{dae_forward.1} parent=0
    _
  %s8 = ssub.s32 1, %s6
  %s9 = scalar_select 0, %s8, %s6
  $region1: #{dae_forward.1} parent=0
    #allocation2 [shape = 'u8[4096]{0}', space=vmem, size = 0x1000, scoped, tag = 'output window, operand 0, single buffered']
    #allocation3 [shape = 's32[1]{0}', space=sflag, size = 0x4, scoped, tag = 'scoped memory for dae_forward.1']
    %10 = vsyncpa [#allocation3], 0
    // Predicated region
    $region2: #{dae_forward.1} parent=1 // pred_check
      _
    $region3: #{dae_forward.1} parent=1 // pred_check_branch
      %12 = sbr.rel (0) target = $region5
    $region4: #{dae_forward.1} parent=1 // pred_region
      _
    $region5: #{dae_forward.1} parent=1 // pred_fallthru
      _
    // Predicated region
    $region6: #{dae_forward.1} parent=1 // pred_check
      _
    $region7: #{dae_forward.1} parent=1 // pred_check_branch
      %14 = sbr.rel (0) target = $region9
    $region8: #{dae_forward.1} parent=1 // pred_region
      _
    $region9: #{dae_forward.1} parent=1 // pred_fallthru
      _
    // Predicated region
    $region10: #{dae_forward.1} parent=1 // pred_check
      _
    $region11: #{dae_forward.1} parent=1 // pred_check_branch
      %16 = sbr.rel (0) target = $region13
    $region12: #{dae_forward.1} parent=1 // pred_region
      _
    $region13: #{dae_forward.1} parent=1 // pred_fallthru
      _
    // Predicated region
    $region14: #{dae_forward.1} parent=1 // pred_check
      _
    $region15: #{dae_forward.1} parent=1 // pred_check_branch
      %18 = sbr.rel (0) target = $region17
    $region16: #{dae_forward.1} parent=1 // pred_region
      _
    $region17: #{dae_forward.1} parent=1 // pred_fallthru
      _
    // Predicated region
    $region18: #{dae_forward.1} parent=1 // pred_check
      _
    $region19: #{dae_forward.1} parent=1 // pred_check_branch
      %20 = sbr.rel (0) target = $region21
    $region20: #{dae_forward.1} parent=1 // pred_region
      _
    $region21: #{dae_forward.1} parent=1 // pred_fallthru
      _
    %v22 = vld [vmem:[%s0] sm:$0xf]
    %v23 = vld [vmem:[%s1] sm:$0xf]
    %v24 = vld [vmem:[%s1 + $0x4] sm:$0xf]
    %v25 = vld [vmem:[%s1 + $0x8] sm:$0xf]
    %v26 = vld [vmem:[%s1 + $0xc] sm:$0xf]
    %v27 = vld [vmem:[%s1 + $0x10] sm:$0xf]
    %v28 = vld [vmem:[%s1 + $0x14] sm:$0xf]
    %v29 = vld [vmem:[%s1 + $0x18] sm:$0xf]
    %v30 = vld [vmem:[%s1 + $0x1c] sm:$0xf]
    %v31 = vld [vmem:[%s1 + $0x20] sm:$0xf]
    %v32 = vld [vmem:[%s1 + $0x24] sm:$0xf]
    %v33 = vld [vmem:[%s1 + $0x28] sm:$0xf]
    %v34 = vld [vmem:[%s1 + $0x2c] sm:$0xf]
    %v35 = vld [vmem:[%s1 + $0x30] sm:$0xf]
    %v36 = vld [vmem:[%s1 + $0x34] sm:$0xf]
    %v37 = vld [vmem:[%s1 + $0x38] sm:$0xf]
    %v38 = vld [vmem:[%s1 + $0x3c] sm:$0xf]
    %v39 = vld [vmem:[%s2] sm:$0x1]
    %v41 = vlaneseq
    %v42 = vshrl.u32 %v41, 7
    %v43 = vsub.s32 0, %v42
    %v44 = vrot.slane %v39, %v43
    %v62 = vunpack.c.l.b16 %v23
    %v63 = vunpack.c.l.b16 %v24
    %v64 = vunpack.c.l.b16 %v25
    %v65 = vunpack.c.l.b16 %v26
    %v66 = vunpack.c.l.b16 %v27
    %v67 = vunpack.c.l.b16 %v28
    %v68 = vunpack.c.l.b16 %v29
    %v69 = vunpack.c.l.b16 %v30
    %v70 = vunpack.c.l.b16 %v31
    %v71 = vunpack.c.l.b16 %v32
    %v72 = vunpack.c.l.b16 %v33
    %v73 = vunpack.c.l.b16 %v34
    %v74 = vunpack.c.l.b16 %v35
    %v75 = vunpack.c.l.b16 %v36
    %v76 = vunpack.c.l.b16 %v37
    %v77 = vunpack.c.l.b16 %v38
    %v78 = vpack.c.b16 %v63, %v62
    %v79 = vpack.c.b16 %v65, %v64
    %v80 = vpack.c.b16 %v67, %v66
    %v81 = vpack.c.b16 %v69, %v68
    %v82 = vpack.c.b16 %v71, %v70
    %v83 = vpack.c.b16 %v73, %v72
    %v84 = vpack.c.b16 %v75, %v74
    %v85 = vpack.c.b16 %v77, %v76
    %94 = vmatprep.subr.bf16.mxu0 0
    %95 = vmatpush1.bf16.msra.mxu0 %v78
    %96 = vmatprep.subr.bf16.mxu0 0
    %97 = vmatpush1.bf16.msra.mxu0 %v79
    %98 = vmatprep.subr.bf16.mxu0 0
    %99 = vmatpush1.bf16.msra.mxu0 %v80
    %100 = vmatprep.subr.bf16.mxu0 0
    %101 = vmatpush1.bf16.msra.mxu0 %v81
    %102 = vmatprep.subr.bf16.mxu0 0
    %103 = vmatpush1.bf16.msra.mxu0 %v82
    %104 = vmatprep.subr.bf16.mxu0 0
    %105 = vmatpush1.bf16.msra.mxu0 %v83
    %106 = vmatprep.subr.bf16.mxu0 0
    %107 = vmatpush1.bf16.msra.mxu0 %v84
    %108 = vmatprep.subr.bf16.mxu0 0
    %109 = vmatpush1.bf16.msra.mxu0 %v85
    %110 = vmatprep.subr.bf16.mxu0 0
    %111 = vmatpush1.bf16.msra.mxu0 0
    %112 = vmatprep.subr.bf16.mxu0 0
    %113 = vmatpush1.bf16.msra.mxu0 0
    %114 = vmatprep.subr.bf16.mxu0 0
    %115 = vmatpush1.bf16.msra.mxu0 0
    %116 = vmatprep.subr.bf16.mxu0 0
    %117 = vmatpush1.bf16.msra.mxu0 0
    %118 = vmatprep.subr.bf16.mxu0 0
    %119 = vmatpush1.bf16.msra.mxu0 0
    %120 = vmatprep.subr.bf16.mxu0 0
    %121 = vmatpush1.bf16.msra.mxu0 0
    %122 = vmatprep.subr.bf16.mxu0 0
    %123 = vmatpush1.bf16.msra.mxu0 0
    %124 = vmatprep.subr.bf16.mxu0 0
    %125 = vmatpush1.bf16.msra.mxu0 0
    %126 = vmatprep.mubr.bf16.mxu0 0
    %127 = vmatmul.mubr.bf16.gmra.mrb[0].mxu0 %v22
    %v128 = vpop.f32.mrb[0].mxu0
    %v129 = vadd.f32 %v44, %v128
    %v130 = vpop.f32.mrb[0].mxu0
    %v131 = vpop.f32.mrb[0].mxu0
    %v132 = vpop.f32.mrb[0].mxu0
    %133 = vdwg.mxu0
    %v134 = vmax.f32 %v129, 0.0
    %v135 = vpack.c.bf16 %v134, %v134
    %v136 = vld [vmem:[%s3] sm:$0xf]
    %v137 = vld [vmem:[%s3 + $0x4] sm:$0xf]
    %v138 = vld [vmem:[%s3 + $0x8] sm:$0xf]
    %v139 = vld [vmem:[%s3 + $0xc] sm:$0xf]
    %v140 = vld [vmem:[%s3 + $0x10] sm:$0xf]
    %v141 = vld [vmem:[%s3 + $0x14] sm:$0xf]
    %v142 = vld [vmem:[%s3 + $0x18] sm:$0xf]
    %v143 = vld [vmem:[%s3 + $0x1c] sm:$0xf]
    %v144 = vld [vmem:[%s3 + $0x20] sm:$0xf]
    %v145 = vld [vmem:[%s3 + $0x24] sm:$0xf]
    %v146 = vld [vmem:[%s3 + $0x28] sm:$0xf]
    %v147 = vld [vmem:[%s3 + $0x2c] sm:$0xf]
    %v148 = vld [vmem:[%s3 + $0x30] sm:$0xf]
    %v149 = vld [vmem:[%s3 + $0x34] sm:$0xf]
    %v150 = vld [vmem:[%s3 + $0x38] sm:$0xf]
    %v151 = vld [vmem:[%s3 + $0x3c] sm:$0xf]
    %v152 = vld [vmem:[%s4] sm:$0x1]
    %v154 = vlaneseq
    %v155 = vshrl.u32 %v154, 7
    %v156 = vsub.s32 0, %v155
    %v157 = vrot.slane %v152, %v156
    %v175 = vunpack.c.l.b16 %v136
    %v176 = vunpack.c.l.b16 %v137
    %v177 = vunpack.c.l.b16 %v138
    %v178 = vunpack.c.l.b16 %v139
    %v179 = vunpack.c.l.b16 %v140
    %v180 = vunpack.c.l.b16 %v141
    %v181 = vunpack.c.l.b16 %v142
    %v182 = vunpack.c.l.b16 %v143
    %v183 = vunpack.c.l.b16 %v144
    %v184 = vunpack.c.l.b16 %v145
    %v185 = vunpack.c.l.b16 %v146
    %v186 = vunpack.c.l.b16 %v147
    %v187 = vunpack.c.l.b16 %v148
    %v188 = vunpack.c.l.b16 %v149
    %v189 = vunpack.c.l.b16 %v150
    %v190 = vunpack.c.l.b16 %v151
    %v191 = vpack.c.b16 %v176, %v175
    %v192 = vpack.c.b16 %v178, %v177
    %v193 = vpack.c.b16 %v180, %v179
    %v194 = vpack.c.b16 %v182, %v181
    %v195 = vpack.c.b16 %v184, %v183
    %v196 = vpack.c.b16 %v186, %v185
    %v197 = vpack.c.b16 %v188, %v187
    %v198 = vpack.c.b16 %v190, %v189
    %207 = vmatprep.subr.bf16.mxu0 0
    %208 = vmatpush1.bf16.msra.mxu0 %v191
    %209 = vmatprep.subr.bf16.mxu0 0
    %210 = vmatpush1.bf16.msra.mxu0 %v192
    %211 = vmatprep.subr.bf16.mxu0 0
    %212 = vmatpush1.bf16.msra.mxu0 %v193
    %213 = vmatprep.subr.bf16.mxu0 0
    %214 = vmatpush1.bf16.msra.mxu0 %v194
    %215 = vmatprep.subr.bf16.mxu0 0
    %216 = vmatpush1.bf16.msra.mxu0 %v195
    %217 = vmatprep.subr.bf16.mxu0 0
    %218 = vmatpush1.bf16.msra.mxu0 %v196
    %219 = vmatprep.subr.bf16.mxu0 0
    %220 = vmatpush1.bf16.msra.mxu0 %v197
    %221 = vmatprep.subr.bf16.mxu0 0
    %222 = vmatpush1.bf16.msra.mxu0 %v198
    %223 = vmatprep.subr.bf16.mxu0 0
    %224 = vmatpush1.bf16.msra.mxu0 0
    %225 = vmatprep.subr.bf16.mxu0 0
    %226 = vmatpush1.bf16.msra.mxu0 0
    %227 = vmatprep.subr.bf16.mxu0 0
    %228 = vmatpush1.bf16.msra.mxu0 0
    %229 = vmatprep.subr.bf16.mxu0 0
    %230 = vmatpush1.bf16.msra.mxu0 0
    %231 = vmatprep.subr.bf16.mxu0 0
    %232 = vmatpush1.bf16.msra.mxu0 0
    %233 = vmatprep.subr.bf16.mxu0 0
    %234 = vmatpush1.bf16.msra.mxu0 0
    %235 = vmatprep.subr.bf16.mxu0 0
    %236 = vmatpush1.bf16.msra.mxu0 0
    %237 = vmatprep.subr.bf16.mxu0 0
    %238 = vmatpush1.bf16.msra.mxu0 0
    %239 = vmatprep.mubr.bf16.mxu0 0
    %240 = vmatmul.mubr.bf16.gmra.mrb[0].mxu0 %v135
    %v241 = vpop.f32.mrb[0].mxu0
    %v242 = vadd.f32 %v157, %v241
    %v243 = vpop.f32.mrb[0].mxu0
    %v244 = vpop.f32.mrb[0].mxu0
    %v245 = vpop.f32.mrb[0].mxu0
    %246 = vdwg.mxu0
    %247 = vst [vmem:[#allocation2] sm:$0xff] %v242
    // Predicated region
    $region22: #{dae_forward.1} parent=1 // pred_check
      _
    $region23: #{dae_forward.1} parent=1 // pred_check_branch
      %249 = sbr.rel (0) target = $region25
    $region24: #{dae_forward.1} parent=1 // pred_region
      %s251 = ssub.s32 128, 128
      %252 = vsyncadd [#allocation3], %s251
      %s254 = sshll.u32 [#allocation2], 4
      %s255 = int_to_ptr.vmem [resolvable:$true] %s254
      %257 = dma.vmem_to_hbm [thread:$0]  %s255, 128, %s5, [#allocation3]
    $region25: #{dae_forward.1} parent=1 // pred_fallthru
      _
    // Predicated region
    $region26: #{dae_forward.1} parent=1 // pred_check
      _
    $region27: #{dae_forward.1} parent=1 // pred_check_branch
      %259 = sbr.rel (0) target = $region29
    $region28: #{dae_forward.1} parent=1 // pred_region
      %260 = dma.done [#allocation3], 128
    $region29: #{dae_forward.1} parent=1 // pred_fallthru
      _
    %261 = vsyncpa [#allocation3], 1

</llo_original>
